<compile_context>
chip_gen: v7x
topology: tpu7x:2x2x1
jax: 0.10.0
libtpu: 0.0.40
codegen_flags: <defaults>
</compile_context>

<pallas_src>
import functools

import numpy as np
import jax
import jax.numpy as jnp
from jax.experimental import pallas as pl
from jax.experimental.pallas import tpu as pltpu

LANE = 128
BN_EPS = 1e-5      # PyTorch BatchNorm1d default eps


# ----------------------------- Pallas kernel --------------------------------

def _fused_generator_kernel(num_layers, x_ref, aw_ref, ab_ref, *refs):
    """Entire Attn_MLP_Generator forward in a single kernel.

    refs = [w_0, b_0, gamma_0, beta_0, ..., w_{L-1}, b_{L-1}, gamma_{L-1},
            beta_{L-1}, out_ref]
    x_ref:  (B, R)        aw_ref: (R, R)        ab_ref: (1, R)
    w_i:    (prev, curr)  b/gamma/beta_i: (1, curr)
    out_ref:(B, out_pad)  (last layer params are pre-padded to out_pad lanes)
    """
    out_ref = refs[-1]
    layer_refs = refs[:-1]

    x = x_ref[...]                                               # (B, R) f32

    # --- attention branch: Linear -> ReLU -> Softmax(dim=1), then gate x ---
    a = jnp.dot(x, aw_ref[...], preferred_element_type=jnp.float32) + ab_ref[...]
    a = jnp.maximum(a, 0.0)
    a = a - jnp.max(a, axis=1, keepdims=True)                    # stable softmax
    e = jnp.exp(a)
    attn = e / jnp.sum(e, axis=1, keepdims=True)
    h = x * attn

    # --- MLP: [Linear -> BatchNorm1d(batch statistics) -> ReLU] x L ---
    for i in range(num_layers):
        w_ref, b_ref, g_ref, bt_ref = layer_refs[4 * i: 4 * i + 4]
        y = jnp.dot(h, w_ref[...], preferred_element_type=jnp.float32) + b_ref[...]
        mean = jnp.mean(y, axis=0, keepdims=True)
        var = jnp.mean(y * y, axis=0, keepdims=True) - mean * mean   # single pass
        yn = (y - mean) * jax.lax.rsqrt(var + BN_EPS)
        h = jnp.maximum(yn * g_ref[...] + bt_ref[...], 0.0)

    out_ref[...] = h


# ------------------------------- Wrapper -------------------------------------

def build_hidden_dims(rand_dim, out_dim, num_hid):
    """Mirror Attn_MLP_Generator.build_layers dimension schedule."""
    hidden_dims = [rand_dim]
    delta = abs(out_dim - rand_dim) // num_hid
    for i in range(num_hid):
        hidden_dims.append(rand_dim + i * delta)
    hidden_dims += [out_dim]
    return hidden_dims


def init_params(key, rand_dim, out_dim, num_hid):
    hidden_dims = build_hidden_dims(rand_dim, out_dim, num_hid)
    n_layers = len(hidden_dims) - 1
    keys = jax.random.split(key, 2 * n_layers + 2)
    attn_w = 0.1 * jax.random.normal(keys[0], (rand_dim, rand_dim), jnp.float32)
    attn_b = 0.05 * jax.random.normal(keys[1], (1, rand_dim), jnp.float32)
    layers = []
    for i, (prev, curr) in enumerate(zip(hidden_dims, hidden_dims[1:])):
        w = 0.1 * jax.random.normal(keys[2 + 2 * i], (prev, curr), jnp.float32)
        b = 0.05 * jax.random.normal(keys[3 + 2 * i], (1, curr), jnp.float32)
        gamma = jnp.ones((1, curr), jnp.float32)      # BatchNorm1d default init
        beta = jnp.zeros((1, curr), jnp.float32)
        layers.append((w, b, gamma, beta))
    return {"attn_w": attn_w, "attn_b": attn_b, "layers": layers}


@jax.jit
def attn_mlp_generator_forward(x, params):
    B, rand_dim = x.shape
    layers = params["layers"]
    n_layers = len(layers)                           # static (pytree structure)
    out_dim = layers[-1][0].shape[1]                 # static (array shape)
    out_pad = ((out_dim + LANE - 1) // LANE) * LANE  # lane-dense output width

    # Pad the last layer's params to out_pad lanes so the output store is
    # unmasked; padded channels stay exactly zero through BN + ReLU.
    w_l, b_l, g_l, bt_l = layers[-1]
    pad = out_pad - out_dim
    padded_last = (jnp.pad(w_l, ((0, 0), (0, pad))),
                   jnp.pad(b_l, ((0, 0), (0, pad))),
                   jnp.pad(g_l, ((0, 0), (0, pad)), constant_values=1.0),
                   jnp.pad(bt_l, ((0, 0), (0, pad))))
    all_layers = list(layers[:-1]) + [padded_last]

    flat_layer_args = []
    for lw, lb, lg, lbt in all_layers:
        flat_layer_args += [lw, lb, lg, lbt]

    # Advisory cost estimate for the XLA scheduler.
    flops = 2 * B * rand_dim * rand_dim
    for lw, _, _, _ in all_layers:
        flops += 2 * B * lw.shape[0] * lw.shape[1]
    bytes_accessed = 4 * (x.size + params["attn_w"].size + params["attn_b"].size
                          + sum(int(a.size) for a in flat_layer_args)
                          + B * out_pad)
    transcendentals = B * rand_dim + n_layers * out_pad   # exp + rsqrt (rough)

    vmem_spec = pl.BlockSpec(memory_space=pltpu.MemorySpace.VMEM)
    n_in = 3 + len(flat_layer_args)

    out = pl.pallas_call(
        functools.partial(_fused_generator_kernel, n_layers),
        out_shape=jax.ShapeDtypeStruct((B, out_pad), jnp.float32),
        in_specs=[vmem_spec] * n_in,
        out_specs=vmem_spec,
        cost_estimate=pl.CostEstimate(flops=flops,
                                      transcendentals=transcendentals,
                                      bytes_accessed=bytes_accessed),
    )(x, params["attn_w"], params["attn_b"], *flat_layer_args)

    return out[:, :out_dim]


# --------------------------- Pure-JAX reference ------------------------------

def reference_forward(x, params):
    a = x @ params["attn_w"] + params["attn_b"]
    a = jnp.maximum(a, 0.0)
    attn = jax.nn.softmax(a, axis=1)
    h = x * attn
    for (w, b, g, bt) in params["layers"]:
        y = h @ w + b
        mean = jnp.mean(y, axis=0, keepdims=True)
        var = jnp.var(y, axis=0, keepdims=True)          # biased, like PyTorch BN
        yn = (y - mean) / jnp.sqrt(var + BN_EPS)
        h = jnp.maximum(yn * g + bt, 0.0)
    return h


# ---------------------------------- Main -------------------------------------

if __name__ == "__main__":
    rand_dim, out_dim, num_hid = 16, 32, 2   # hidden_dims = [16, 16, 24, 32]
    batch = 8

    key = jax.random.PRNGKey(0)
    k_x, k_p = jax.random.split(key)
    x = jax.random.normal(k_x, (batch, rand_dim), jnp.float32)
    params = init_params(k_p, rand_dim, out_dim, num_hid)

    y = attn_mlp_generator_forward(x, params)
    jax.block_until_ready(y)

    assert y.shape == (batch, out_dim), y.shape
    y_ref = reference_forward(x, params)
    np.testing.assert_allclose(np.asarray(y), np.asarray(y_ref),
                               rtol=1e-3, atol=1e-3)

    # TODO(synk): BatchNorm1d running-mean/var buffer updates (training-time
    # side effect) are not emulated; forward output uses batch statistics.
    print("KERNEL_OK")
</pallas_src>

<mosaic_0001>
module attributes {stable_mosaic.version = 11 : i64} {
  func.func @_fused_generator_kernel(%arg0: memref<8x16xf32, #tpu.memory_space<vmem>>, %arg1: memref<16x16xf32, #tpu.memory_space<vmem>>, %arg2: memref<1x16xf32, #tpu.memory_space<vmem>>, %arg3: memref<16x16xf32, #tpu.memory_space<vmem>>, %arg4: memref<1x16xf32, #tpu.memory_space<vmem>>, %arg5: memref<1x16xf32, #tpu.memory_space<vmem>>, %arg6: memref<1x16xf32, #tpu.memory_space<vmem>>, %arg7: memref<16x24xf32, #tpu.memory_space<vmem>>, %arg8: memref<1x24xf32, #tpu.memory_space<vmem>>, %arg9: memref<1x24xf32, #tpu.memory_space<vmem>>, %arg10: memref<1x24xf32, #tpu.memory_space<vmem>>, %arg11: memref<24x128xf32, #tpu.memory_space<vmem>>, %arg12: memref<1x128xf32, #tpu.memory_space<vmem>>, %arg13: memref<1x128xf32, #tpu.memory_space<vmem>>, %arg14: memref<1x128xf32, #tpu.memory_space<vmem>>, %arg15: memref<8x128xf32, #tpu.memory_space<vmem>>) attributes {dimension_semantics = [], scalar_prefetch = 0 : i64, scratch_operands = 0 : i64, tpu.core_type = #tpu.core_type<tc>} {
    %c0 = arith.constant 0 : index
    %c0_0 = arith.constant 0 : index
    %0 = vector.load %arg0[%c0, %c0_0] : memref<8x16xf32, #tpu.memory_space<vmem>>, vector<8x16xf32>
    %c0_1 = arith.constant 0 : index
    %c0_2 = arith.constant 0 : index
    %1 = vector.load %arg1[%c0_1, %c0_2] : memref<16x16xf32, #tpu.memory_space<vmem>>, vector<16x16xf32>
    %cst = arith.constant dense<0.000000e+00> : vector<8x16xf32>
    %2 = tpu.matmul %0, %1, %cst {dimension_numbers = #tpu.dot_dimension_numbers<[1], [0], [0], [1], [0, 0, 1, 1], [], []>} : vector<8x16xf32>, vector<16x16xf32>, vector<8x16xf32> -> vector<8x16xf32>
    %c0_3 = arith.constant 0 : index
    %c0_4 = arith.constant 0 : index
    %3 = vector.load %arg2[%c0_3, %c0_4] : memref<1x16xf32, #tpu.memory_space<vmem>>, vector<1x16xf32>
    %4 = vector.broadcast %3 : vector<1x16xf32> to vector<8x16xf32>
    %5 = arith.addf %2, %4 : vector<8x16xf32>
    %cst_5 = arith.constant 0.000000e+00 : f32
    %6 = vector.broadcast %cst_5 : f32 to vector<8x16xf32>
    %7 = arith.maximumf %5, %6 : vector<8x16xf32>
    %cst_6 = arith.constant dense<0xFF800000> : vector<8xf32>
    %8 = vector.multi_reduction <maximumf>, %7, %cst_6 [1] : vector<8x16xf32> to vector<8xf32>
    %9 = vector.shape_cast %8 : vector<8xf32> to vector<8x1xf32>
    %10 = vector.broadcast %9 : vector<8x1xf32> to vector<8x16xf32>
    %11 = arith.subf %7, %10 : vector<8x16xf32>
    %12 = math.exp %11 : vector<8x16xf32>
    %cst_7 = arith.constant dense<0.000000e+00> : vector<8xf32>
    %13 = vector.multi_reduction <add>, %12, %cst_7 [1] : vector<8x16xf32> to vector<8xf32>
    %14 = vector.shape_cast %13 : vector<8xf32> to vector<8x1xf32>
    %15 = vector.broadcast %14 : vector<8x1xf32> to vector<8x16xf32>
    %16 = arith.divf %12, %15 : vector<8x16xf32>
    %17 = arith.mulf %0, %16 : vector<8x16xf32>
    %c0_8 = arith.constant 0 : index
    %c0_9 = arith.constant 0 : index
    %18 = vector.load %arg3[%c0_8, %c0_9] : memref<16x16xf32, #tpu.memory_space<vmem>>, vector<16x16xf32>
    %cst_10 = arith.constant dense<0.000000e+00> : vector<8x16xf32>
    %19 = tpu.matmul %17, %18, %cst_10 {dimension_numbers = #tpu.dot_dimension_numbers<[1], [0], [0], [1], [0, 0, 1, 1], [], []>} : vector<8x16xf32>, vector<16x16xf32>, vector<8x16xf32> -> vector<8x16xf32>
    %c0_11 = arith.constant 0 : index
    %c0_12 = arith.constant 0 : index
    %20 = vector.load %arg4[%c0_11, %c0_12] : memref<1x16xf32, #tpu.memory_space<vmem>>, vector<1x16xf32>
    %21 = vector.broadcast %20 : vector<1x16xf32> to vector<8x16xf32>
    %22 = arith.addf %19, %21 : vector<8x16xf32>
    %cst_13 = arith.constant dense<0.000000e+00> : vector<16xf32>
    %23 = vector.multi_reduction <add>, %22, %cst_13 [0] : vector<8x16xf32> to vector<16xf32>
    %24 = vector.shape_cast %23 : vector<16xf32> to vector<1x16xf32>
    %cst_14 = arith.constant 8.000000e+00 : f32
    %25 = vector.broadcast %cst_14 : f32 to vector<1x16xf32>
    %26 = arith.divf %24, %25 : vector<1x16xf32>
    %27 = arith.mulf %22, %22 : vector<8x16xf32>
    %cst_15 = arith.constant dense<0.000000e+00> : vector<16xf32>
    %28 = vector.multi_reduction <add>, %27, %cst_15 [0] : vector<8x16xf32> to vector<16xf32>
    %29 = vector.shape_cast %28 : vector<16xf32> to vector<1x16xf32>
    %cst_16 = arith.constant 8.000000e+00 : f32
    %30 = vector.broadcast %cst_16 : f32 to vector<1x16xf32>
    %31 = arith.divf %29, %30 : vector<1x16xf32>
    %32 = arith.mulf %26, %26 : vector<1x16xf32>
    %33 = arith.subf %31, %32 : vector<1x16xf32>
    %34 = vector.broadcast %26 : vector<1x16xf32> to vector<8x16xf32>
    %35 = arith.subf %22, %34 : vector<8x16xf32>
    %cst_17 = arith.constant 9.99999974E-6 : f32
    %36 = vector.broadcast %cst_17 : f32 to vector<1x16xf32>
    %37 = arith.addf %33, %36 : vector<1x16xf32>
    %38 = math.rsqrt %37 : vector<1x16xf32>
    %39 = vector.broadcast %38 : vector<1x16xf32> to vector<8x16xf32>
    %40 = arith.mulf %35, %39 : vector<8x16xf32>
    %c0_18 = arith.constant 0 : index
    %c0_19 = arith.constant 0 : index
    %41 = vector.load %arg5[%c0_18, %c0_19] : memref<1x16xf32, #tpu.memory_space<vmem>>, vector<1x16xf32>
    %42 = vector.broadcast %41 : vector<1x16xf32> to vector<8x16xf32>
    %43 = arith.mulf %40, %42 : vector<8x16xf32>
    %c0_20 = arith.constant 0 : index
    %c0_21 = arith.constant 0 : index
    %44 = vector.load %arg6[%c0_20, %c0_21] : memref<1x16xf32, #tpu.memory_space<vmem>>, vector<1x16xf32>
    %45 = vector.broadcast %44 : vector<1x16xf32> to vector<8x16xf32>
    %46 = arith.addf %43, %45 : vector<8x16xf32>
    %cst_22 = arith.constant 0.000000e+00 : f32
    %47 = vector.broadcast %cst_22 : f32 to vector<8x16xf32>
    %48 = arith.maximumf %46, %47 : vector<8x16xf32>
    %c0_23 = arith.constant 0 : index
    %c0_24 = arith.constant 0 : index
    %49 = vector.load %arg7[%c0_23, %c0_24] : memref<16x24xf32, #tpu.memory_space<vmem>>, vector<16x24xf32>
    %cst_25 = arith.constant dense<0.000000e+00> : vector<8x24xf32>
    %50 = tpu.matmul %48, %49, %cst_25 {dimension_numbers = #tpu.dot_dimension_numbers<[1], [0], [0], [1], [0, 0, 1, 1], [], []>} : vector<8x16xf32>, vector<16x24xf32>, vector<8x24xf32> -> vector<8x24xf32>
    %c0_26 = arith.constant 0 : index
    %c0_27 = arith.constant 0 : index
    %51 = vector.load %arg8[%c0_26, %c0_27] : memref<1x24xf32, #tpu.memory_space<vmem>>, vector<1x24xf32>
    %52 = vector.broadcast %51 : vector<1x24xf32> to vector<8x24xf32>
    %53 = arith.addf %50, %52 : vector<8x24xf32>
    %cst_28 = arith.constant dense<0.000000e+00> : vector<24xf32>
    %54 = vector.multi_reduction <add>, %53, %cst_28 [0] : vector<8x24xf32> to vector<24xf32>
    %55 = vector.shape_cast %54 : vector<24xf32> to vector<1x24xf32>
    %cst_29 = arith.constant 8.000000e+00 : f32
    %56 = vector.broadcast %cst_29 : f32 to vector<1x24xf32>
    %57 = arith.divf %55, %56 : vector<1x24xf32>
    %58 = arith.mulf %53, %53 : vector<8x24xf32>
    %cst_30 = arith.constant dense<0.000000e+00> : vector<24xf32>
    %59 = vector.multi_reduction <add>, %58, %cst_30 [0] : vector<8x24xf32> to vector<24xf32>
    %60 = vector.shape_cast %59 : vector<24xf32> to vector<1x24xf32>
    %cst_31 = arith.constant 8.000000e+00 : f32
    %61 = vector.broadcast %cst_31 : f32 to vector<1x24xf32>
    %62 = arith.divf %60, %61 : vector<1x24xf32>
    %63 = arith.mulf %57, %57 : vector<1x24xf32>
    %64 = arith.subf %62, %63 : vector<1x24xf32>
    %65 = vector.broadcast %57 : vector<1x24xf32> to vector<8x24xf32>
    %66 = arith.subf %53, %65 : vector<8x24xf32>
    %cst_32 = arith.constant 9.99999974E-6 : f32
    %67 = vector.broadcast %cst_32 : f32 to vector<1x24xf32>
    %68 = arith.addf %64, %67 : vector<1x24xf32>
    %69 = math.rsqrt %68 : vector<1x24xf32>
    %70 = vector.broadcast %69 : vector<1x24xf32> to vector<8x24xf32>
    %71 = arith.mulf %66, %70 : vector<8x24xf32>
    %c0_33 = arith.constant 0 : index
    %c0_34 = arith.constant 0 : index
    %72 = vector.load %arg9[%c0_33, %c0_34] : memref<1x24xf32, #tpu.memory_space<vmem>>, vector<1x24xf32>
    %73 = vector.broadcast %72 : vector<1x24xf32> to vector<8x24xf32>
    %74 = arith.mulf %71, %73 : vector<8x24xf32>
    %c0_35 = arith.constant 0 : index
    %c0_36 = arith.constant 0 : index
    %75 = vector.load %arg10[%c0_35, %c0_36] : memref<1x24xf32, #tpu.memory_space<vmem>>, vector<1x24xf32>
    %76 = vector.broadcast %75 : vector<1x24xf32> to vector<8x24xf32>
    %77 = arith.addf %74, %76 : vector<8x24xf32>
    %cst_37 = arith.constant 0.000000e+00 : f32
    %78 = vector.broadcast %cst_37 : f32 to vector<8x24xf32>
    %79 = arith.maximumf %77, %78 : vector<8x24xf32>
    %c0_38 = arith.constant 0 : index
    %c0_39 = arith.constant 0 : index
    %80 = vector.load %arg11[%c0_38, %c0_39] : memref<24x128xf32, #tpu.memory_space<vmem>>, vector<24x128xf32>
    %cst_40 = arith.constant dense<0.000000e+00> : vector<8x128xf32>
    %81 = tpu.matmul %79, %80, %cst_40 {dimension_numbers = #tpu.dot_dimension_numbers<[1], [0], [0], [1], [0, 0, 1, 1], [], []>} : vector<8x24xf32>, vector<24x128xf32>, vector<8x128xf32> -> vector<8x128xf32>
    %c0_41 = arith.constant 0 : index
    %c0_42 = arith.constant 0 : index
    %82 = vector.load %arg12[%c0_41, %c0_42] : memref<1x128xf32, #tpu.memory_space<vmem>>, vector<1x128xf32>
    %83 = vector.broadcast %82 : vector<1x128xf32> to vector<8x128xf32>
    %84 = arith.addf %81, %83 : vector<8x128xf32>
    %cst_43 = arith.constant dense<0.000000e+00> : vector<128xf32>
    %85 = vector.multi_reduction <add>, %84, %cst_43 [0] : vector<8x128xf32> to vector<128xf32>
    %86 = vector.shape_cast %85 : vector<128xf32> to vector<1x128xf32>
    %cst_44 = arith.constant 8.000000e+00 : f32
    %87 = vector.broadcast %cst_44 : f32 to vector<1x128xf32>
    %88 = arith.divf %86, %87 : vector<1x128xf32>
    %89 = arith.mulf %84, %84 : vector<8x128xf32>
    %cst_45 = arith.constant dense<0.000000e+00> : vector<128xf32>
    %90 = vector.multi_reduction <add>, %89, %cst_45 [0] : vector<8x128xf32> to vector<128xf32>
    %91 = vector.shape_cast %90 : vector<128xf32> to vector<1x128xf32>
    %cst_46 = arith.constant 8.000000e+00 : f32
    %92 = vector.broadcast %cst_46 : f32 to vector<1x128xf32>
    %93 = arith.divf %91, %92 : vector<1x128xf32>
    %94 = arith.mulf %88, %88 : vector<1x128xf32>
    %95 = arith.subf %93, %94 : vector<1x128xf32>
    %96 = vector.broadcast %88 : vector<1x128xf32> to vector<8x128xf32>
    %97 = arith.subf %84, %96 : vector<8x128xf32>
    %cst_47 = arith.constant 9.99999974E-6 : f32
    %98 = vector.broadcast %cst_47 : f32 to vector<1x128xf32>
    %99 = arith.addf %95, %98 : vector<1x128xf32>
    %100 = math.rsqrt %99 : vector<1x128xf32>
    %101 = vector.broadcast %100 : vector<1x128xf32> to vector<8x128xf32>
    %102 = arith.mulf %97, %101 : vector<8x128xf32>
    %c0_48 = arith.constant 0 : index
    %c0_49 = arith.constant 0 : index
    %103 = vector.load %arg13[%c0_48, %c0_49] : memref<1x128xf32, #tpu.memory_space<vmem>>, vector<1x128xf32>
    %104 = vector.broadcast %103 : vector<1x128xf32> to vector<8x128xf32>
    %105 = arith.mulf %102, %104 : vector<8x128xf32>
    %c0_50 = arith.constant 0 : index
    %c0_51 = arith.constant 0 : index
    %106 = vector.load %arg14[%c0_50, %c0_51] : memref<1x128xf32, #tpu.memory_space<vmem>>, vector<1x128xf32>
    %107 = vector.broadcast %106 : vector<1x128xf32> to vector<8x128xf32>
    %108 = arith.addf %105, %107 : vector<8x128xf32>
    %cst_52 = arith.constant 0.000000e+00 : f32
    %109 = vector.broadcast %cst_52 : f32 to vector<8x128xf32>
    %110 = arith.maximumf %108, %109 : vector<8x128xf32>
    %c0_53 = arith.constant 0 : index
    %c0_54 = arith.constant 0 : index
    %111 = vector.load %arg15[%c0_53, %c0_54] : memref<8x128xf32, #tpu.memory_space<vmem>>, vector<8x128xf32>
    tpu.vector_store %arg15[%c0_53, %c0_54], %110 {strides = array<i32>} : memref<8x128xf32, #tpu.memory_space<vmem>>, vector<8x128xf32>,
    return
  }
}

</mosaic_0001>

<llo_original>
// kernel: attn_mlp_generator_forward.1
$region0: #{attn_mlp_generator_forward.1}
  #allocation0 [shape = 'u32[]', space=smem, size = 0x4, offset = 0x4, fixed_abs, tag = 'smem constant byte address 0x4 - core index']
  #allocation1 [shape = 'u32[144,128]{1,0:T(1,128)}', space=vmem, size = 0x12000, scoped, tag = 'internal scratch']
  %s0 = inlined_call_operand.vmem [shape: f32[8,16], index: 0, kind: input, shape index: {}]
  %s1 = inlined_call_operand.vmem [shape: f32[16,16], index: 1, kind: input, shape index: {}]
  %s2 = inlined_call_operand.vmem [shape: f32[1,16], index: 2, kind: input, shape index: {}]
  %s3 = inlined_call_operand.vmem [shape: f32[16,16], index: 3, kind: input, shape index: {}]
  %s4 = inlined_call_operand.vmem [shape: f32[1,16], index: 4, kind: input, shape index: {}]
  %s5 = inlined_call_operand.vmem [shape: f32[1,16], index: 5, kind: input, shape index: {}]
  %s6 = inlined_call_operand.vmem [shape: f32[1,16], index: 6, kind: input, shape index: {}]
  %s7 = inlined_call_operand.vmem [shape: f32[16,24], index: 7, kind: input, shape index: {}]
  %s8 = inlined_call_operand.vmem [shape: f32[1,24], index: 8, kind: input, shape index: {}]
  %s9 = inlined_call_operand.vmem [shape: f32[1,24], index: 9, kind: input, shape index: {}]
  %s10 = inlined_call_operand.vmem [shape: f32[1,24], index: 10, kind: input, shape index: {}]
  %s11 = inlined_call_operand.vmem [shape: f32[24,128], index: 11, kind: input, shape index: {}]
  %s12 = inlined_call_operand.vmem [shape: f32[1,128], index: 12, kind: input, shape index: {}]
  %s13 = inlined_call_operand.vmem [shape: f32[1,128], index: 13, kind: input, shape index: {}]
  %s14 = inlined_call_operand.vmem [shape: f32[1,128], index: 14, kind: input, shape index: {}]
  %s15 = inlined_call_operand.hbm [shape: f32[8,128], index: 15, kind: output, shape index: {}]
  %s16 = sld [smem:[#allocation0]]
  $region70: #{attn_mlp_generator_forward.1} parent=0
    _
  %s18 = ssub.s32 1, %s16
  %s19 = scalar_select 0, %s18, %s16
  $region1: #{attn_mlp_generator_forward.1} parent=0
    #allocation2 [shape = 'u8[4096]{0}', space=vmem, size = 0x1000, scoped, tag = 'output window, operand 0, single buffered']
    #allocation3 [shape = 's32[1]{0}', space=sflag, size = 0x4, scoped, tag = 'scoped memory for attn_mlp_generator_forward.1']
    %20 = vsyncpa [#allocation3], 0
    // Predicated region
    $region2: #{attn_mlp_generator_forward.1} parent=1 // pred_check
      _
    $region3: #{attn_mlp_generator_forward.1} parent=1 // pred_check_branch
      %22 = sbr.rel (0) target = $region5
    $region4: #{attn_mlp_generator_forward.1} parent=1 // pred_region
      _
    $region5: #{attn_mlp_generator_forward.1} parent=1 // pred_fallthru
      _
    // Predicated region
    $region6: #{attn_mlp_generator_forward.1} parent=1 // pred_check
      _
    $region7: #{attn_mlp_generator_forward.1} parent=1 // pred_check_branch
      %24 = sbr.rel (0) target = $region9
    $region8: #{attn_mlp_generator_forward.1} parent=1 // pred_region
      _
    $region9: #{attn_mlp_generator_forward.1} parent=1 // pred_fallthru
      _
    // Predicated region
    $region10: #{attn_mlp_generator_forward.1} parent=1 // pred_check
      _
    $region11: #{attn_mlp_generator_forward.1} parent=1 // pred_check_branch
      %26 = sbr.rel (0) target = $region13
    $region12: #{attn_mlp_generator_forward.1} parent=1 // pred_region
      _
    $region13: #{attn_mlp_generator_forward.1} parent=1 // pred_fallthru
      _
    // Predicated region
    $region14: #{attn_mlp_generator_forward.1} parent=1 // pred_check
      _
    $region15: #{attn_mlp_generator_forward.1} parent=1 // pred_check_branch
      %28 = sbr.rel (0) target = $region17
    $region16: #{attn_mlp_generator_forward.1} parent=1 // pred_region
      _
    $region17: #{attn_mlp_generator_forward.1} parent=1 // pred_fallthru
      _
    // Predicated region
    $region18: #{attn_mlp_generator_forward.1} parent=1 // pred_check
      _
    $region19: #{attn_mlp_generator_forward.1} parent=1 // pred_check_branch
      %30 = sbr.rel (0) target = $region21
    $region20: #{attn_mlp_generator_forward.1} parent=1 // pred_region
      _
    $region21: #{attn_mlp_generator_forward.1} parent=1 // pred_fallthru
      _
    // Predicated region
    $region22: #{attn_mlp_generator_forward.1} parent=1 // pred_check
      _
    $region23: #{attn_mlp_generator_forward.1} parent=1 // pred_check_branch
      %32 = sbr.rel (0) target = $region25
    $region24: #{attn_mlp_generator_forward.1} parent=1 // pred_region
      _
    $region25: #{attn_mlp_generator_forward.1} parent=1 // pred_fallthru
      _
    // Predicated region
    $region26: #{attn_mlp_generator_forward.1} parent=1 // pred_check
      _
    $region27: #{attn_mlp_generator_forward.1} parent=1 // pred_check_branch
      %34 = sbr.rel (0) target = $region29
    $region28: #{attn_mlp_generator_forward.1} parent=1 // pred_region
      _
    $region29: #{attn_mlp_generator_forward.1} parent=1 // pred_fallthru
      _
    // Predicated region
    $region30: #{attn_mlp_generator_forward.1} parent=1 // pred_check
      _
    $region31: #{attn_mlp_generator_forward.1} parent=1 // pred_check_branch
      %36 = sbr.rel (0) target = $region33
    $region32: #{attn_mlp_generator_forward.1} parent=1 // pred_region
      _
    $region33: #{attn_mlp_generator_forward.1} parent=1 // pred_fallthru
      _
    // Predicated region
    $region34: #{attn_mlp_generator_forward.1} parent=1 // pred_check
      _
    $region35: #{attn_mlp_generator_forward.1} parent=1 // pred_check_branch
      %38 = sbr.rel (0) target = $region37
    $region36: #{attn_mlp_generator_forward.1} parent=1 // pred_region
      _
    $region37: #{attn_mlp_generator_forward.1} parent=1 // pred_fallthru
      _
    // Predicated region
    $region38: #{attn_mlp_generator_forward.1} parent=1 // pred_check
      _
    $region39: #{attn_mlp_generator_forward.1} parent=1 // pred_check_branch
      %40 = sbr.rel (0) target = $region41
    $region40: #{attn_mlp_generator_forward.1} parent=1 // pred_region
      _
    $region41: #{attn_mlp_generator_forward.1} parent=1 // pred_fallthru
      _
    // Predicated region
    $region42: #{attn_mlp_generator_forward.1} parent=1 // pred_check
      _
    $region43: #{attn_mlp_generator_forward.1} parent=1 // pred_check_branch
      %42 = sbr.rel (0) target = $region45
    $region44: #{attn_mlp_generator_forward.1} parent=1 // pred_region
      _
    $region45: #{attn_mlp_generator_forward.1} parent=1 // pred_fallthru
      _
    // Predicated region
    $region46: #{attn_mlp_generator_forward.1} parent=1 // pred_check
      _
    $region47: #{attn_mlp_generator_forward.1} parent=1 // pred_check_branch
      %44 = sbr.rel (0) target = $region49
    $region48: #{attn_mlp_generator_forward.1} parent=1 // pred_region
      _
    $region49: #{attn_mlp_generator_forward.1} parent=1 // pred_fallthru
      _
    // Predicated region
    $region50: #{attn_mlp_generator_forward.1} parent=1 // pred_check
      _
    $region51: #{attn_mlp_generator_forward.1} parent=1 // pred_check_branch
      %46 = sbr.rel (0) target = $region53
    $region52: #{attn_mlp_generator_forward.1} parent=1 // pred_region
      _
    $region53: #{attn_mlp_generator_forward.1} parent=1 // pred_fallthru
      _
    // Predicated region
    $region54: #{attn_mlp_generator_forward.1} parent=1 // pred_check
      _
    $region55: #{attn_mlp_generator_forward.1} parent=1 // pred_check_branch
      %48 = sbr.rel (0) target = $region57
    $region56: #{attn_mlp_generator_forward.1} parent=1 // pred_region
      _
    $region57: #{attn_mlp_generator_forward.1} parent=1 // pred_fallthru
      _
    // Predicated region
    $region58: #{attn_mlp_generator_forward.1} parent=1 // pred_check
      _
    $region59: #{attn_mlp_generator_forward.1} parent=1 // pred_check_branch
      %50 = sbr.rel (0) target = $region61
    $region60: #{attn_mlp_generator_forward.1} parent=1 // pred_region
      _
    $region61: #{attn_mlp_generator_forward.1} parent=1 // pred_fallthru
      _
    %v51 = vld [vmem:[%s0] sm:$0xff]
    %v52 = vld [vmem:[%s1] sm:$0xff]
    %v53 = vld [vmem:[%s1 + $0x8] sm:$0xff]
    %v54 = vld [vmem:[%s2] sm:$0x1]
    %v56 = vlaneseq
    %v57 = vshrl.u32 %v56, 7
    %v58 = vsub.s32 0, %v57
    %v59 = vrot.slane %v54, %v58
    %vm61 = vcmask 130048
    %v63 = vsel %vm61, %v51, 0
    %65 = vmatprep.subr.mxu0 0.0
    %66 = vmatpush1.msra.mxu0 %v52
    %67 = vmatprep.subr.mxu0 0.0
    %68 = vmatpush1.msra.mxu0 %v53
    %69 = vmatprep.subr.mxu0 0.0
    %70 = vmatpush1.msra.mxu0 0.0
    %71 = vmatprep.subr.mxu0 0.0
    %72 = vmatpush1.msra.mxu0 0.0
    %73 = vmatprep.subr.mxu0 0.0
    %74 = vmatpush1.msra.mxu0 0.0
    %75 = vmatprep.subr.mxu0 0.0
    %76 = vmatpush1.msra.mxu0 0.0
    %77 = vmatprep.subr.mxu0 0.0
    %78 = vmatpush1.msra.mxu0 0.0
    %79 = vmatprep.subr.mxu0 0.0
    %80 = vmatpush1.msra.mxu0 0.0
    %81 = vmatprep.subr.mxu0 0.0
    %82 = vmatpush1.msra.mxu0 0.0
    %83 = vmatprep.subr.mxu0 0.0
    %84 = vmatpush1.msra.mxu0 0.0
    %85 = vmatprep.subr.mxu0 0.0
    %86 = vmatpush1.msra.mxu0 0.0
    %87 = vmatprep.subr.mxu0 0.0
    %88 = vmatpush1.msra.mxu0 0.0
    %89 = vmatprep.subr.mxu0 0.0
    %90 = vmatpush1.msra.mxu0 0.0
    %91 = vmatprep.subr.mxu0 0.0
    %92 = vmatpush1.msra.mxu0 0.0
    %93 = vmatprep.subr.mxu0 0.0
    %94 = vmatpush1.msra.mxu0 0.0
    %95 = vmatprep.subr.mxu0 0.0
    %96 = vmatpush1.msra.mxu0 0.0
    %97 = vmatprep.subr.mxu0 0.0
    %98 = vmatpush1.msra.mxu0 0.0
    %99 = vmatprep.subr.mxu0 0.0
    %100 = vmatpush1.msra.mxu0 0.0
    %101 = vmatprep.subr.mxu0 0.0
    %102 = vmatpush1.msra.mxu0 0.0
    %103 = vmatprep.subr.mxu0 0.0
    %104 = vmatpush1.msra.mxu0 0.0
    %105 = vmatprep.subr.mxu0 0.0
    %106 = vmatpush1.msra.mxu0 0.0
    %107 = vmatprep.subr.mxu0 0.0
    %108 = vmatpush1.msra.mxu0 0.0
    %109 = vmatprep.subr.mxu0 0.0
    %110 = vmatpush1.msra.mxu0 0.0
    %111 = vmatprep.subr.mxu0 0.0
    %112 = vmatpush1.msra.mxu0 0.0
    %113 = vmatprep.subr.mxu0 0.0
    %114 = vmatpush1.msra.mxu0 0.0
    %115 = vmatprep.subr.mxu0 0.0
    %116 = vmatpush1.msra.mxu0 0.0
    %117 = vmatprep.subr.mxu0 0.0
    %118 = vmatpush1.msra.mxu0 0.0
    %119 = vmatprep.subr.mxu0 0.0
    %120 = vmatpush1.msra.mxu0 0.0
    %121 = vmatprep.subr.mxu0 0.0
    %122 = vmatpush1.msra.mxu0 0.0
    %123 = vmatprep.subr.mxu0 0.0
    %124 = vmatpush1.msra.mxu0 0.0
    %125 = vmatprep.subr.mxu0 0.0
    %126 = vmatpush1.msra.mxu0 0.0
    %127 = vmatprep.subr.mxu0 0.0
    %128 = vmatpush1.msra.mxu0 0.0
    %129 = vmatprep.mubr.f32.mxu0 0.0
    %130 = vmatmul.mubr.f32.gmra.mrb[0].mxu0 %v63
    %v131 = vpop.f32.mrb[0].mxu0
    %v132 = vadd.f32 %v59, %v131
    %v133 = vpop.f32.mrb[0].mxu0
    %134 = vdwg.mxu0
    %v135 = vmax.f32 %v132, 0.0
    %v136 = vsel %vm61, %v135, -inf
    %137 = vmax.xlane.f32.xlu0 %v136
    %v138 = vpop.xlane.xlu0 %137
    %v139 = vsub.f32 %v135, %v138
    %v140 = vmul.f32 %v139, 1.442695
    %v141 = vpow.pop %v140
    %v142 = vsel %vm61, %v141, 0.0
    %143 = vadd.xlane.f32.xlu0 %v142
    %v144 = vpop.xlane.xlu0 %143
    %v145 = vrcp.pop %v144
    %v146 = vmul.f32 %v141, %v145
    %v147 = vmul.f32 %v51, %v146
    %v148 = vld [vmem:[%s3] sm:$0xff]
    %v149 = vld [vmem:[%s3 + $0x8] sm:$0xff]
    %v150 = vld [vmem:[%s4] sm:$0x1]
    %v152 = vlaneseq
    %v153 = vshrl.u32 %v152, 7
    %v154 = vsub.s32 0, %v153
    %v155 = vrot.slane %v150, %v154
    %v158 = vsel %vm61, %v147, 0
    %160 = vmatprep.subr.mxu0 0.0
    %161 = vmatpush1.msra.mxu0 %v148
    %162 = vmatprep.subr.mxu0 0.0
    %163 = vmatpush1.msra.mxu0 %v149
    %164 = vmatprep.subr.mxu0 0.0
    %165 = vmatpush1.msra.mxu0 0.0
    %166 = vmatprep.subr.mxu0 0.0
    %167 = vmatpush1.msra.mxu0 0.0
    %168 = vmatprep.subr.mxu0 0.0
    %169 = vmatpush1.msra.mxu0 0.0
    %170 = vmatprep.subr.mxu0 0.0
    %171 = vmatpush1.msra.mxu0 0.0
    %172 = vmatprep.subr.mxu0 0.0
    %173 = vmatpush1.msra.mxu0 0.0
    %174 = vmatprep.subr.mxu0 0.0
    %175 = vmatpush1.msra.mxu0 0.0
    %176 = vmatprep.subr.mxu0 0.0
    %177 = vmatpush1.msra.mxu0 0.0
    %178 = vmatprep.subr.mxu0 0.0
    %179 = vmatpush1.msra.mxu0 0.0
    %180 = vmatprep.subr.mxu0 0.0
    %181 = vmatpush1.msra.mxu0 0.0
    %182 = vmatprep.subr.mxu0 0.0
    %183 = vmatpush1.msra.mxu0 0.0
    %184 = vmatprep.subr.mxu0 0.0
    %185 = vmatpush1.msra.mxu0 0.0
    %186 = vmatprep.subr.mxu0 0.0
    %187 = vmatpush1.msra.mxu0 0.0
    %188 = vmatprep.subr.mxu0 0.0
    %189 = vmatpush1.msra.mxu0 0.0
    %190 = vmatprep.subr.mxu0 0.0
    %191 = vmatpush1.msra.mxu0 0.0
    %192 = vmatprep.subr.mxu0 0.0
    %193 = vmatpush1.msra.mxu0 0.0
    %194 = vmatprep.subr.mxu0 0.0
    %195 = vmatpush1.msra.mxu0 0.0
    %196 = vmatprep.subr.mxu0 0.0
    %197 = vmatpush1.msra.mxu0 0.0
    %198 = vmatprep.subr.mxu0 0.0
    %199 = vmatpush1.msra.mxu0 0.0
    %200 = vmatprep.subr.mxu0 0.0
    %201 = vmatpush1.msra.mxu0 0.0
    %202 = vmatprep.subr.mxu0 0.0
    %203 = vmatpush1.msra.mxu0 0.0
    %204 = vmatprep.subr.mxu0 0.0
    %205 = vmatpush1.msra.mxu0 0.0
    %206 = vmatprep.subr.mxu0 0.0
    %207 = vmatpush1.msra.mxu0 0.0
    %208 = vmatprep.subr.mxu0 0.0
    %209 = vmatpush1.msra.mxu0 0.0
    %210 = vmatprep.subr.mxu0 0.0
    %211 = vmatpush1.msra.mxu0 0.0
    %212 = vmatprep.subr.mxu0 0.0
    %213 = vmatpush1.msra.mxu0 0.0
    %214 = vmatprep.subr.mxu0 0.0
    %215 = vmatpush1.msra.mxu0 0.0
    %216 = vmatprep.subr.mxu0 0.0
    %217 = vmatpush1.msra.mxu0 0.0
    %218 = vmatprep.subr.mxu0 0.0
    %219 = vmatpush1.msra.mxu0 0.0
    %220 = vmatprep.subr.mxu0 0.0
    %221 = vmatpush1.msra.mxu0 0.0
    %222 = vmatprep.subr.mxu0 0.0
    %223 = vmatpush1.msra.mxu0 0.0
    %224 = vmatprep.mubr.f32.mxu0 0.0
    %225 = vmatmul.mubr.f32.gmra.mrb[0].mxu0 %v158
    %v226 = vpop.f32.mrb[0].mxu0
    %v227 = vadd.f32 %v155, %v226
    %v228 = vpop.f32.mrb[0].mxu0
    %229 = vdwg.mxu0
    %v230 = vsel %vm61, %v227, 0.0
    %v231 = vrot.slane %v230, 4
    %v232 = vadd.f32 %v230, %v231
    %v233 = vrot.slane %v232, 2
    %v234 = vadd.f32 %v232, %v233
    %v235 = vrot.slane %v234, 1
    %v236 = vadd.f32 %v234, %v235
    %v237 = vrcp.pop 8.0
    %v238 = vmul.f32 %v236, %v237
    %v239 = vmul.f32 %v227, %v227
    %v240 = vsel %vm61, %v239, 0.0
    %v241 = vrot.slane %v240, 4
    %v242 = vadd.f32 %v240, %v241
    %v243 = vrot.slane %v242, 2
    %v244 = vadd.f32 %v242, %v243
    %v245 = vrot.slane %v244, 1
    %v246 = vadd.f32 %v244, %v245
    %v247 = vmul.f32 %v246, %v237
    %v248 = vmul.f32 %v238, %v238
    %v249 = vsub.f32 %v247, %v248
    %v250 = vsub.f32 %v227, %v238
    %v251 = vadd.f32 %v249, 1e-05
    %v252 = vrsqrt.pop %v251
    %v253 = vmul.f32 %v250, %v252
    %v254 = vld [vmem:[%s5] sm:$0x1]
    %v256 = vlaneseq
    %v257 = vshrl.u32 %v256, 7
    %v258 = vsub.s32 0, %v257
    %v259 = vrot.slane %v254, %v258
    %v261 = vmul.f32 %v253, %v259
    %v262 = vld [vmem:[%s6] sm:$0x1]
    %v264 = vlaneseq
    %v265 = vshrl.u32 %v264, 7
    %v266 = vsub.s32 0, %v265
    %v267 = vrot.slane %v262, %v266
    %v269 = vadd.f32 %v261, %v267
    %v270 = vmax.f32 %v269, 0.0
    %v271 = vld [vmem:[%s7] sm:$0xff]
    %v272 = vld [vmem:[%s7 + $0x8] sm:$0xff]
    %v273 = vld [vmem:[%s8] sm:$0x1]
    %v275 = vlaneseq
    %v276 = vshrl.u32 %v275, 7
    %v277 = vsub.s32 0, %v276
    %v278 = vrot.slane %v273, %v277
    %v281 = vsel %vm61, %v270, 0
    %283 = vmatprep.subr.mxu0 0.0
    %284 = vmatpush1.msra.mxu0 %v271
    %285 = vmatprep.subr.mxu0 0.0
    %286 = vmatpush1.msra.mxu0 %v272
    %287 = vmatprep.subr.mxu0 0.0
    %288 = vmatpush1.msra.mxu0 0.0
    %289 = vmatprep.subr.mxu0 0.0
    %290 = vmatpush1.msra.mxu0 0.0
    %291 = vmatprep.subr.mxu0 0.0
    %292 = vmatpush1.msra.mxu0 0.0
    %293 = vmatprep.subr.mxu0 0.0
    %294 = vmatpush1.msra.mxu0 0.0
    %295 = vmatprep.subr.mxu0 0.0
    %296 = vmatpush1.msra.mxu0 0.0
    %297 = vmatprep.subr.mxu0 0.0
    %298 = vmatpush1.msra.mxu0 0.0
    %299 = vmatprep.subr.mxu0 0.0
    %300 = vmatpush1.msra.mxu0 0.0
    %301 = vmatprep.subr.mxu0 0.0
    %302 = vmatpush1.msra.mxu0 0.0
    %303 = vmatprep.subr.mxu0 0.0
    %304 = vmatpush1.msra.mxu0 0.0
    %305 = vmatprep.subr.mxu0 0.0
    %306 = vmatpush1.msra.mxu0 0.0
    %307 = vmatprep.subr.mxu0 0.0
    %308 = vmatpush1.msra.mxu0 0.0
    %309 = vmatprep.subr.mxu0 0.0
    %310 = vmatpush1.msra.mxu0 0.0
    %311 = vmatprep.subr.mxu0 0.0
    %312 = vmatpush1.msra.mxu0 0.0
    %313 = vmatprep.subr.mxu0 0.0
    %314 = vmatpush1.msra.mxu0 0.0
    %315 = vmatprep.subr.mxu0 0.0
    %316 = vmatpush1.msra.mxu0 0.0
    %317 = vmatprep.subr.mxu0 0.0
    %318 = vmatpush1.msra.mxu0 0.0
    %319 = vmatprep.subr.mxu0 0.0
    %320 = vmatpush1.msra.mxu0 0.0
    %321 = vmatprep.subr.mxu0 0.0
    %322 = vmatpush1.msra.mxu0 0.0
    %323 = vmatprep.subr.mxu0 0.0
    %324 = vmatpush1.msra.mxu0 0.0
    %325 = vmatprep.subr.mxu0 0.0
    %326 = vmatpush1.msra.mxu0 0.0
    %327 = vmatprep.subr.mxu0 0.0
    %328 = vmatpush1.msra.mxu0 0.0
    %329 = vmatprep.subr.mxu0 0.0
    %330 = vmatpush1.msra.mxu0 0.0
    %331 = vmatprep.subr.mxu0 0.0
    %332 = vmatpush1.msra.mxu0 0.0
    %333 = vmatprep.subr.mxu0 0.0
    %334 = vmatpush1.msra.mxu0 0.0
    %335 = vmatprep.subr.mxu0 0.0
    %336 = vmatpush1.msra.mxu0 0.0
    %337 = vmatprep.subr.mxu0 0.0
    %338 = vmatpush1.msra.mxu0 0.0
    %339 = vmatprep.subr.mxu0 0.0
    %340 = vmatpush1.msra.mxu0 0.0
    %341 = vmatprep.subr.mxu0 0.0
    %342 = vmatpush1.msra.mxu0 0.0
    %343 = vmatprep.subr.mxu0 0.0
    %344 = vmatpush1.msra.mxu0 0.0
    %345 = vmatprep.subr.mxu0 0.0
    %346 = vmatpush1.msra.mxu0 0.0
    %347 = vmatprep.mubr.f32.mxu0 0.0
    %348 = vmatmul.mubr.f32.gmra.mrb[0].mxu0 %v281
    %v349 = vpop.f32.mrb[0].mxu0
    %v350 = vadd.f32 %v278, %v349
    %v351 = vpop.f32.mrb[0].mxu0
    %352 = vdwg.mxu0
    %vm353 = vcmask 195584
    %v354 = vsel %vm353, %v350, 0.0
    %v355 = vrot.slane %v354, 4
    %v356 = vadd.f32 %v354, %v355
    %v357 = vrot.slane %v356, 2
    %v358 = vadd.f32 %v356, %v357
    %v359 = vrot.slane %v358, 1
    %v360 = vadd.f32 %v358, %v359
    %v361 = vmul.f32 %v360, %v237
    %v362 = vmul.f32 %v350, %v350
    %v363 = vsel %vm353, %v362, 0.0
    %v364 = vrot.slane %v363, 4
    %v365 = vadd.f32 %v363, %v364
    %v366 = vrot.slane %v365, 2
    %v367 = vadd.f32 %v365, %v366
    %v368 = vrot.slane %v367, 1
    %v369 = vadd.f32 %v367, %v368
    %v370 = vmul.f32 %v369, %v237
    %v371 = vmul.f32 %v361, %v361
    %v372 = vsub.f32 %v370, %v371
    %v373 = vsub.f32 %v350, %v361
    %v374 = vadd.f32 %v372, 1e-05
    %v375 = vrsqrt.pop %v374
    %v376 = vmul.f32 %v373, %v375
    %v377 = vld [vmem:[%s9] sm:$0x1]
    %v379 = vlaneseq
    %v380 = vshrl.u32 %v379, 7
    %v381 = vsub.s32 0, %v380
    %v382 = vrot.slane %v377, %v381
    %v384 = vmul.f32 %v376, %v382
    %v385 = vld [vmem:[%s10] sm:$0x1]
    %v387 = vlaneseq
    %v388 = vshrl.u32 %v387, 7
    %v389 = vsub.s32 0, %v388
    %v390 = vrot.slane %v385, %v389
    %v392 = vadd.f32 %v384, %v390
    %v393 = vmax.f32 %v392, 0.0
    %v394 = vld [vmem:[%s11] sm:$0xff]
    %v395 = vld [vmem:[%s11 + $0x8] sm:$0xff]
    %v396 = vld [vmem:[%s11 + $0x10] sm:$0xff]
    %v397 = vld [vmem:[%s12] sm:$0x1]
    %v399 = vlaneseq
    %v400 = vshrl.u32 %v399, 7
    %v401 = vsub.s32 0, %v400
    %v402 = vrot.slane %v397, %v401
    %v405 = vsel %vm353, %v393, 0
    %407 = vmatprep.subr.mxu0 0.0
    %408 = vmatpush1.msra.mxu0 %v394
    %409 = vmatprep.subr.mxu0 0.0
    %410 = vmatpush1.msra.mxu0 %v395
    %411 = vmatprep.subr.mxu0 0.0
    %412 = vmatpush1.msra.mxu0 %v396
    %413 = vmatprep.subr.mxu0 0.0
    %414 = vmatpush1.msra.mxu0 0.0
    %415 = vmatprep.subr.mxu0 0.0
    %416 = vmatpush1.msra.mxu0 0.0
    %417 = vmatprep.subr.mxu0 0.0
    %418 = vmatpush1.msra.mxu0 0.0
    %419 = vmatprep.subr.mxu0 0.0
    %420 = vmatpush1.msra.mxu0 0.0
    %421 = vmatprep.subr.mxu0 0.0
    %422 = vmatpush1.msra.mxu0 0.0
    %423 = vmatprep.subr.mxu0 0.0
    %424 = vmatpush1.msra.mxu0 0.0
    %425 = vmatprep.subr.mxu0 0.0
    %426 = vmatpush1.msra.mxu0 0.0
    %427 = vmatprep.subr.mxu0 0.0
    %428 = vmatpush1.msra.mxu0 0.0
    %429 = vmatprep.subr.mxu0 0.0
    %430 = vmatpush1.msra.mxu0 0.0
    %431 = vmatprep.subr.mxu0 0.0
    %432 = vmatpush1.msra.mxu0 0.0
    %433 = vmatprep.subr.mxu0 0.0
    %434 = vmatpush1.msra.mxu0 0.0
    %435 = vmatprep.subr.mxu0 0.0
    %436 = vmatpush1.msra.mxu0 0.0
    %437 = vmatprep.subr.mxu0 0.0
    %438 = vmatpush1.msra.mxu0 0.0
    %439 = vmatprep.subr.mxu0 0.0
    %440 = vmatpush1.msra.mxu0 0.0
    %441 = vmatprep.subr.mxu0 0.0
    %442 = vmatpush1.msra.mxu0 0.0
    %443 = vmatprep.subr.mxu0 0.0
    %444 = vmatpush1.msra.mxu0 0.0
    %445 = vmatprep.subr.mxu0 0.0
    %446 = vmatpush1.msra.mxu0 0.0
    %447 = vmatprep.subr.mxu0 0.0
    %448 = vmatpush1.msra.mxu0 0.0
    %449 = vmatprep.subr.mxu0 0.0
    %450 = vmatpush1.msra.mxu0 0.0
    %451 = vmatprep.subr.mxu0 0.0
    %452 = vmatpush1.msra.mxu0 0.0
    %453 = vmatprep.subr.mxu0 0.0
    %454 = vmatpush1.msra.mxu0 0.0
    %455 = vmatprep.subr.mxu0 0.0
    %456 = vmatpush1.msra.mxu0 0.0
    %457 = vmatprep.subr.mxu0 0.0
    %458 = vmatpush1.msra.mxu0 0.0
    %459 = vmatprep.subr.mxu0 0.0
    %460 = vmatpush1.msra.mxu0 0.0
    %461 = vmatprep.subr.mxu0 0.0
    %462 = vmatpush1.msra.mxu0 0.0
    %463 = vmatprep.subr.mxu0 0.0
    %464 = vmatpush1.msra.mxu0 0.0
    %465 = vmatprep.subr.mxu0 0.0
    %466 = vmatpush1.msra.mxu0 0.0
    %467 = vmatprep.subr.mxu0 0.0
    %468 = vmatpush1.msra.mxu0 0.0
    %469 = vmatprep.subr.mxu0 0.0
    %470 = vmatpush1.msra.mxu0 0.0
    %471 = vmatprep.mubr.f32.mxu0 0.0
    %472 = vmatmul.mubr.f32.gmra.mrb[0].mxu0 %v405
    %v473 = vpop.f32.mrb[0].mxu0
    %v474 = vadd.f32 %v402, %v473
    %v475 = vpop.f32.mrb[0].mxu0
    %476 = vdwg.mxu0
    %v477 = vrot.slane %v474, 4
    %v478 = vadd.f32 %v474, %v477
    %v479 = vrot.slane %v478, 2
    %v480 = vadd.f32 %v478, %v479
    %v481 = vrot.slane %v480, 1
    %v482 = vadd.f32 %v480, %v481
    %v483 = vmul.f32 %v482, %v237
    %v484 = vmul.f32 %v474, %v474
    %v485 = vrot.slane %v484, 4
    %v486 = vadd.f32 %v484, %v485
    %v487 = vrot.slane %v486, 2
    %v488 = vadd.f32 %v486, %v487
    %v489 = vrot.slane %v488, 1
    %v490 = vadd.f32 %v488, %v489
    %v491 = vmul.f32 %v490, %v237
    %v492 = vmul.f32 %v483, %v483
    %v493 = vsub.f32 %v491, %v492
    %v494 = vsub.f32 %v474, %v483
    %v495 = vadd.f32 %v493, 1e-05
    %v496 = vrsqrt.pop %v495
    %v497 = vmul.f32 %v494, %v496
    %v498 = vld [vmem:[%s13] sm:$0x1]
    %v500 = vlaneseq
    %v501 = vshrl.u32 %v500, 7
    %v502 = vsub.s32 0, %v501
    %v503 = vrot.slane %v498, %v502
    %v505 = vmul.f32 %v497, %v503
    %v506 = vld [vmem:[%s14] sm:$0x1]
    %v508 = vlaneseq
    %v509 = vshrl.u32 %v508, 7
    %v510 = vsub.s32 0, %v509
    %v511 = vrot.slane %v506, %v510
    %v513 = vadd.f32 %v505, %v511
    %v514 = vmax.f32 %v513, 0.0
    %515 = vst [vmem:[#allocation2] sm:$0xff] %v514
    // Predicated region
    $region62: #{attn_mlp_generator_forward.1} parent=1 // pred_check
      _
    $region63: #{attn_mlp_generator_forward.1} parent=1 // pred_check_branch
      %517 = sbr.rel (0) target = $region65
    $region64: #{attn_mlp_generator_forward.1} parent=1 // pred_region
      %s519 = ssub.s32 128, 128
      %520 = vsyncadd [#allocation3], %s519
      %s522 = sshll.u32 [#allocation2], 4
      %s523 = int_to_ptr.vmem [resolvable:$true] %s522
      %525 = dma.vmem_to_hbm [thread:$0]  %s523, 128, %s15, [#allocation3]
    $region65: #{attn_mlp_generator_forward.1} parent=1 // pred_fallthru
      _
    // Predicated region
    $region66: #{attn_mlp_generator_forward.1} parent=1 // pred_check
      _
    $region67: #{attn_mlp_generator_forward.1} parent=1 // pred_check_branch
      %527 = sbr.rel (0) target = $region69
    $region68: #{attn_mlp_generator_forward.1} parent=1 // pred_region
      %528 = dma.done [#allocation3], 128
    $region69: #{attn_mlp_generator_forward.1} parent=1 // pred_fallthru
      _
    %529 = vsyncpa [#allocation3], 1

</llo_original>
